<compile_context>
chip_gen: v6e
topology: v6e:2x2x1
jax: 0.10.0
libtpu: 0.0.40
codegen_flags: <defaults>
</compile_context>

<pallas_src>
import jax
import jax.numpy as jnp
from jax.experimental import pallas as pl
from jax.experimental.pallas import tpu as pltpu


def _round_up(n, m):
    return ((n + m - 1) // m) * m


def _cross_network_kernel(x_ref, w_ref, b_ref, o_ref):
    # x_ref: (TB, Dp)     input batch tile (zero-padded lanes)
    # w_ref: (L, Dp, Dp)  VMEM-resident, pre-transposed: y = x @ w_ref[l]
    # b_ref: (L, 1, Dp)   VMEM-resident biases
    # o_ref: (TB, L*Dp)   output tile; column block i holds x_list[i+1]
    num_layers, dp, _ = w_ref.shape

    x0 = x_ref[...].astype(jnp.float32)
    x_in = x0                                         # current x_list[-1]
    # rowsum of every x_list entry, computed once when it is produced
    s_list = [jnp.sum(x0, axis=-1, keepdims=True)]

    for i in range(num_layers):
        if i == 0:
            x_ = x_in
        else:
            # x_ = x_in + c*1 with per-row scalar recurrence
            #   c <- c + d_j + c * s_j,   d_j = rowsum(x_in * x_list[j]).
            # The d_j reduces are independent; earlier layer outputs are
            # re-read from the o_ref VMEM tile instead of kept live.
            c = jnp.zeros_like(s_list[0])
            for j in range(i):
                if j == 0:
                    xj = x0
                else:
                    xj = o_ref[:, (j - 1) * dp:j * dp].astype(jnp.float32)
                d_j = jnp.sum(x_in * xj, axis=-1, keepdims=True)
                c = c + d_j + c * s_list[j]
            x_ = x_in + c
        # nn.Linear(D, D): MXU matmul against the resident weight slab.
        y = jnp.dot(x_, w_ref[i], preferred_element_type=jnp.float32) + b_ref[i]
        # Lane-dense (128-aligned) store of this layer's output.
        o_ref[:, i * dp:(i + 1) * dp] = y.astype(o_ref.dtype)
        s_list.append(jnp.sum(y, axis=-1, keepdims=True))
        x_in = y


def _vmem_limit_bytes():
    """Per-generation compiler VMEM limit (96 MiB on 128 MiB parts, 48 MiB on
    v7x's 64 MiB; conservative 48 MiB if the query is unavailable)."""
    try:
        cap = int(pltpu.get_tpu_info().vmem_capacity_bytes)
    except Exception:
        cap = 64 * 1024 * 1024
    return min(int(cap * 3 // 4), 100 * 1024 * 1024)


def _choose_block_b(batch, dim_p, num_layers, vmem_limit_bytes):
    """Largest batch tile whose double-buffered in+out slabs (plus the
    resident, double-buffered weight/bias slabs) fit ~half of the VMEM limit."""
    row_bytes = 2 * (1 + num_layers) * dim_p * 4            # f32 in+out, 2 bufs
    param_bytes = 2 * num_layers * (dim_p * dim_p + dim_p) * 4
    # TODO(synk): single-buffer the resident weight slab via
    # pipeline_mode=pl.Buffered(1) once validated; budget assumes 2 buffers.
    tile_budget = max(int(vmem_limit_bytes) // 2 - param_bytes, 64 * 1024)
    cap = max(8, tile_budget // row_bytes)
    if cap >= 128:
        cap = (cap // 128) * 128       # 128-row alignment keeps MXU passes full
    else:
        cap = (cap // 8) * 8
    blk = min(cap, _round_up(batch, 8))
    return max(8, (blk // 8) * 8)


def _dimension_semantics():
    try:
        kind = jax.devices()[0].device_kind.lower()
    except Exception:
        kind = ""
    if "v7" in kind:
        # 2 TensorCores per chip: shard the batch grid axis across cores.
        return (pltpu.CORE_PARALLEL,)
    return ("parallel",)


def cross_network(x, weights, biases, *, block_b=None, vmem_limit_bytes=None,
                  dimension_semantics=None):
    """Forward of CrossNetwork.

    x:       (B, D)    float32
    weights: (L, D, D) float32  -- stacked PyTorch nn.Linear weights (out, in)
    biases:  (L, D)    float32
    returns  (B, L*D)  float32
    """
    batch, dim = x.shape
    num_layers = weights.shape[0]
    assert weights.shape == (num_layers, dim, dim)
    assert biases.shape == (num_layers, dim)

    dim_p = _round_up(dim, 128)                    # lane-dense feature dim

    if vmem_limit_bytes is None:
        vmem_limit_bytes = _vmem_limit_bytes()
    if block_b is None:
        block_b = _choose_block_b(batch, dim_p, num_layers, vmem_limit_bytes)
    block_b = max(8, _round_up(int(block_b), 8))

    batch_p = _round_up(batch, block_b)            # uniform tiles, no fallback

    # Zero-pad batch rows / feature lanes (padding is sliced off below).
    x_p = jnp.pad(x, ((0, batch_p - batch), (0, dim_p - dim)))
    w_p = jnp.pad(weights, ((0, 0), (0, dim_p - dim), (0, dim_p - dim)))
    b_p = jnp.pad(biases, ((0, 0), (0, dim_p - dim))).reshape(num_layers, 1, dim_p)
    # Pre-transpose so the kernel computes plain x @ w (no in-kernel transpose).
    w_t = jnp.swapaxes(w_p, -1, -2)                # (L, Dp, Dp)

    if dimension_semantics is None:
        dimension_semantics = _dimension_semantics()

    grid = (batch_p // block_b,)

    out_p = pl.pallas_call(
        _cross_network_kernel,
        out_shape=jax.ShapeDtypeStruct((batch_p, num_layers * dim_p), x.dtype),
        grid_spec=pltpu.PrefetchScalarGridSpec(
            num_scalar_prefetch=0,
            grid=grid,
            in_specs=[
                pl.BlockSpec((block_b, dim_p), lambda i: (i, 0)),             # x tile
                pl.BlockSpec((num_layers, dim_p, dim_p), lambda i: (0, 0, 0)),  # weights (resident)
                pl.BlockSpec((num_layers, 1, dim_p), lambda i: (0, 0, 0)),      # biases  (resident)
            ],
            out_specs=pl.BlockSpec((block_b, num_layers * dim_p), lambda i: (i, 0)),
        ),
        compiler_params=pltpu.CompilerParams(
            dimension_semantics=dimension_semantics,
            vmem_limit_bytes=int(vmem_limit_bytes)),
    )(x_p, w_t, b_p)

    if dim_p == dim and batch_p == batch:
        return out_p
    # Strip lane padding per layer block and batch padding.
    out = out_p.reshape(batch_p, num_layers, dim_p)[:batch, :, :dim]
    return out.reshape(batch, num_layers * dim)


def _cross_network_ref(x, weights, biases):
    """Plain-JAX reference mirroring the PyTorch forward."""
    xs = [x]
    for i in range(weights.shape[0]):
        x_ = xs[-1]
        for x_pre in xs[:-1]:
            x_ = x_ + jnp.sum(x_ * x_pre, axis=-1, keepdims=True)
        xs.append(x_ @ weights[i].T + biases[i])
    return jnp.concatenate(xs[1:], axis=-1)


if __name__ == "__main__":
    key = jax.random.PRNGKey(0)
    kx, kw, kb = jax.random.split(key, 3)

    batch, input_dim, num_layers = 64, 32, 3

    # Deterministic synthetic parameters (PyTorch-style uniform init, bound 1/sqrt(D)).
    bound = 1.0 / (input_dim ** 0.5)
    weights = jax.random.uniform(kw, (num_layers, input_dim, input_dim),
                                 jnp.float32, -bound, bound)
    biases = jax.random.uniform(kb, (num_layers, input_dim),
                                jnp.float32, -bound, bound)
    x = jax.random.normal(kx, (batch, input_dim), jnp.float32)

    # Case 1: explicit small tile -> grid=(4,), exercises the pipelined multi-step path.
    out = jax.block_until_ready(cross_network(x, weights, biases, block_b=16))
    ref = _cross_network_ref(x, weights, biases)
    assert out.shape == (batch, num_layers * input_dim)
    err1 = float(jnp.max(jnp.abs(out - ref)))
    assert jnp.allclose(out, ref, atol=1e-3, rtol=1e-3), f"max abs err = {err1}"

    # Case 2: odd batch + auto tiling -> exercises batch/lane padding and the
    # VMEM-budget-derived block_b.
    x2 = x[:50]
    out2 = jax.block_until_ready(cross_network(x2, weights, biases))
    ref2 = _cross_network_ref(x2, weights, biases)
    assert out2.shape == (50, num_layers * input_dim)
    err2 = float(jnp.max(jnp.abs(out2 - ref2)))
    assert jnp.allclose(out2, ref2, atol=1e-3, rtol=1e-3), f"max abs err = {err2}"

    print("KERNEL_OK")
</pallas_src>

<mosaic_0001>
module attributes {stable_mosaic.version = 11 : i64} {
  func.func @_cross_network_kernel(%arg0: i32, %arg1: memref<16x128xf32, #tpu.memory_space<vmem>>, %arg2: memref<3x128x128xf32, #tpu.memory_space<vmem>>, %arg3: memref<3x1x128xf32, #tpu.memory_space<vmem>>, %arg4: memref<16x384xf32, #tpu.memory_space<vmem>>) attributes {dimension_semantics = [#tpu.dimension_semantics<parallel>], iteration_bounds = array<i64: 4>, scalar_prefetch = 0 : i64, scratch_operands = 0 : i64, tpu.core_type = #tpu.core_type<tc>, window_params = [{transform_indices = @transform_0, window_bounds = array<i64: 16, 128>}, {pipeline_mode = #tpu.pipeline_mode<synchronous>, transform_indices = @transform_1, window_bounds = array<i64: 3, 128, 128>}, {pipeline_mode = #tpu.pipeline_mode<synchronous>, transform_indices = @transform_2, window_bounds = array<i64: 3, 1, 128>}, {transform_indices = @transform_3, window_bounds = array<i64: 16, 384>}]} {
    %c0 = arith.constant 0 : index
    %c0_0 = arith.constant 0 : index
    %0 = vector.load %arg1[%c0, %c0_0] : memref<16x128xf32, #tpu.memory_space<vmem>>, vector<16x128xf32>
    %cst = arith.constant dense<0.000000e+00> : vector<16xf32>
    %1 = vector.multi_reduction <add>, %0, %cst [1] : vector<16x128xf32> to vector<16xf32>
    %2 = vector.shape_cast %1 : vector<16xf32> to vector<16x1xf32>
    %c0_1 = arith.constant 0 : index
    %c0_2 = arith.constant 0 : index
    %c0_3 = arith.constant 0 : index
    %3 = vector.load %arg2[%c0_1, %c0_2, %c0_3] : memref<3x128x128xf32, #tpu.memory_space<vmem>>, vector<1x128x128xf32>
    %4 = vector.shape_cast %3 : vector<1x128x128xf32> to vector<128x128xf32>
    %cst_4 = arith.constant dense<0.000000e+00> : vector<16x128xf32>
    %5 = tpu.matmul %0, %4, %cst_4 {dimension_numbers = #tpu.dot_dimension_numbers<[1], [0], [0], [1], [0, 0, 1, 1], [], []>} : vector<16x128xf32>, vector<128x128xf32>, vector<16x128xf32> -> vector<16x128xf32>
    %c0_5 = arith.constant 0 : index
    %c0_6 = arith.constant 0 : index
    %c0_7 = arith.constant 0 : index
    %6 = vector.load %arg3[%c0_5, %c0_6, %c0_7] : memref<3x1x128xf32, #tpu.memory_space<vmem>>, vector<1x1x128xf32>
    %7 = vector.shape_cast %6 : vector<1x1x128xf32> to vector<1x128xf32>
    %8 = vector.broadcast %7 : vector<1x128xf32> to vector<16x128xf32>
    %9 = arith.addf %5, %8 : vector<16x128xf32>
    %c0_8 = arith.constant 0 : index
    %c0_9 = arith.constant 0 : index
    %10 = vector.load %arg4[%c0_8, %c0_9] : memref<16x384xf32, #tpu.memory_space<vmem>>, vector<16x128xf32>
    tpu.vector_store %arg4[%c0_8, %c0_9], %9 {strides = array<i32>} : memref<16x384xf32, #tpu.memory_space<vmem>>, vector<16x128xf32>,
    %cst_10 = arith.constant dense<0.000000e+00> : vector<16xf32>
    %11 = vector.multi_reduction <add>, %9, %cst_10 [1] : vector<16x128xf32> to vector<16xf32>
    %12 = vector.shape_cast %11 : vector<16xf32> to vector<16x1xf32>
    %cst_11 = arith.constant 0.000000e+00 : f32
    %13 = vector.broadcast %cst_11 : f32 to vector<16x1xf32>
    %14 = arith.mulf %9, %0 : vector<16x128xf32>
    %cst_12 = arith.constant dense<0.000000e+00> : vector<16xf32>
    %15 = vector.multi_reduction <add>, %14, %cst_12 [1] : vector<16x128xf32> to vector<16xf32>
    %16 = vector.shape_cast %15 : vector<16xf32> to vector<16x1xf32>
    %17 = arith.addf %13, %16 : vector<16x1xf32>
    %18 = arith.mulf %13, %2 : vector<16x1xf32>
    %19 = arith.addf %17, %18 : vector<16x1xf32>
    %20 = vector.broadcast %19 : vector<16x1xf32> to vector<16x128xf32>
    %21 = arith.addf %9, %20 : vector<16x128xf32>
    %c1 = arith.constant 1 : index
    %c0_13 = arith.constant 0 : index
    %c0_14 = arith.constant 0 : index
    %22 = vector.load %arg2[%c1, %c0_13, %c0_14] : memref<3x128x128xf32, #tpu.memory_space<vmem>>, vector<1x128x128xf32>
    %23 = vector.shape_cast %22 : vector<1x128x128xf32> to vector<128x128xf32>
    %cst_15 = arith.constant dense<0.000000e+00> : vector<16x128xf32>
    %24 = tpu.matmul %21, %23, %cst_15 {dimension_numbers = #tpu.dot_dimension_numbers<[1], [0], [0], [1], [0, 0, 1, 1], [], []>} : vector<16x128xf32>, vector<128x128xf32>, vector<16x128xf32> -> vector<16x128xf32>
    %c1_16 = arith.constant 1 : index
    %c0_17 = arith.constant 0 : index
    %c0_18 = arith.constant 0 : index
    %25 = vector.load %arg3[%c1_16, %c0_17, %c0_18] : memref<3x1x128xf32, #tpu.memory_space<vmem>>, vector<1x1x128xf32>
    %26 = vector.shape_cast %25 : vector<1x1x128xf32> to vector<1x128xf32>
    %27 = vector.broadcast %26 : vector<1x128xf32> to vector<16x128xf32>
    %28 = arith.addf %24, %27 : vector<16x128xf32>
    %c0_19 = arith.constant 0 : index
    %c128 = arith.constant 128 : index
    %29 = vector.load %arg4[%c0_19, %c128] : memref<16x384xf32, #tpu.memory_space<vmem>>, vector<16x128xf32>
    tpu.vector_store %arg4[%c0_19, %c128], %28 {strides = array<i32>} : memref<16x384xf32, #tpu.memory_space<vmem>>, vector<16x128xf32>,
    %cst_20 = arith.constant 0.000000e+00 : f32
    %30 = vector.broadcast %cst_20 : f32 to vector<16x1xf32>
    %31 = arith.mulf %28, %0 : vector<16x128xf32>
    %cst_21 = arith.constant dense<0.000000e+00> : vector<16xf32>
    %32 = vector.multi_reduction <add>, %31, %cst_21 [1] : vector<16x128xf32> to vector<16xf32>
    %33 = vector.shape_cast %32 : vector<16xf32> to vector<16x1xf32>
    %34 = arith.addf %30, %33 : vector<16x1xf32>
    %35 = arith.mulf %30, %2 : vector<16x1xf32>
    %36 = arith.addf %34, %35 : vector<16x1xf32>
    %c0_22 = arith.constant 0 : index
    %c0_23 = arith.constant 0 : index
    %37 = vector.load %arg4[%c0_22, %c0_23] : memref<16x384xf32, #tpu.memory_space<vmem>>, vector<16x128xf32>
    %38 = arith.mulf %28, %37 : vector<16x128xf32>
    %cst_24 = arith.constant dense<0.000000e+00> : vector<16xf32>
    %39 = vector.multi_reduction <add>, %38, %cst_24 [1] : vector<16x128xf32> to vector<16xf32>
    %40 = vector.shape_cast %39 : vector<16xf32> to vector<16x1xf32>
    %41 = arith.addf %36, %40 : vector<16x1xf32>
    %42 = arith.mulf %36, %12 : vector<16x1xf32>
    %43 = arith.addf %41, %42 : vector<16x1xf32>
    %44 = vector.broadcast %43 : vector<16x1xf32> to vector<16x128xf32>
    %45 = arith.addf %28, %44 : vector<16x128xf32>
    %c2 = arith.constant 2 : index
    %c0_25 = arith.constant 0 : index
    %c0_26 = arith.constant 0 : index
    %46 = vector.load %arg2[%c2, %c0_25, %c0_26] : memref<3x128x128xf32, #tpu.memory_space<vmem>>, vector<1x128x128xf32>
    %47 = vector.shape_cast %46 : vector<1x128x128xf32> to vector<128x128xf32>
    %cst_27 = arith.constant dense<0.000000e+00> : vector<16x128xf32>
    %48 = tpu.matmul %45, %47, %cst_27 {dimension_numbers = #tpu.dot_dimension_numbers<[1], [0], [0], [1], [0, 0, 1, 1], [], []>} : vector<16x128xf32>, vector<128x128xf32>, vector<16x128xf32> -> vector<16x128xf32>
    %c2_28 = arith.constant 2 : index
    %c0_29 = arith.constant 0 : index
    %c0_30 = arith.constant 0 : index
    %49 = vector.load %arg3[%c2_28, %c0_29, %c0_30] : memref<3x1x128xf32, #tpu.memory_space<vmem>>, vector<1x1x128xf32>
    %50 = vector.shape_cast %49 : vector<1x1x128xf32> to vector<1x128xf32>
    %51 = vector.broadcast %50 : vector<1x128xf32> to vector<16x128xf32>
    %52 = arith.addf %48, %51 : vector<16x128xf32>
    %c0_31 = arith.constant 0 : index
    %c256 = arith.constant 256 : index
    %53 = vector.load %arg4[%c0_31, %c256] : memref<16x384xf32, #tpu.memory_space<vmem>>, vector<16x128xf32>
    tpu.vector_store %arg4[%c0_31, %c256], %52 {strides = array<i32>} : memref<16x384xf32, #tpu.memory_space<vmem>>, vector<16x128xf32>,
    return
  }
  func.func @transform_0(%arg0: i32) -> (i32, i32) {
    %c0_i32 = arith.constant 0 : i32
    %c0_i32_0 = arith.constant 0 : i32
    return %arg0, %c0_i32 : i32, i32
  }
  func.func @transform_1(%arg0: i32) -> (i32, i32, i32) {
    %c0_i32 = arith.constant 0 : i32
    %c0_i32_0 = arith.constant 0 : i32
    %c0_i32_1 = arith.constant 0 : i32
    %c0_i32_2 = arith.constant 0 : i32
    return %c0_i32, %c0_i32_0, %c0_i32_1 : i32, i32, i32
  }
  func.func @transform_2(%arg0: i32) -> (i32, i32, i32) {
    %c0_i32 = arith.constant 0 : i32
    %c0_i32_0 = arith.constant 0 : i32
    %c0_i32_1 = arith.constant 0 : i32
    %c0_i32_2 = arith.constant 0 : i32
    return %c0_i32, %c0_i32_0, %c0_i32_1 : i32, i32, i32
  }
  func.func @transform_3(%arg0: i32) -> (i32, i32) {
    %c0_i32 = arith.constant 0 : i32
    %c0_i32_0 = arith.constant 0 : i32
    return %arg0, %c0_i32 : i32, i32
  }
}

</mosaic_0001>

<llo_original>
// kernel: tpu_custom_call.1
$region0: #{tpu_custom_call.1}
  #allocation0 [shape = 'u32[]', space=smem, size = 0x4, offset = 0x4, fixed_abs, tag = 'smem constant byte address 0x4 - core index']
  #allocation1 [shape = 'u32[144,128]{1,0:T(1,128)}', space=vmem, size = 0x12000, scoped, tag = 'internal scratch']
  %s0 = inlined_call_operand.hbm [shape: f32[64,128], index: 0, kind: input, shape index: {}]
  %s1 = inlined_call_operand.hbm [shape: f32[3,128,128], index: 1, kind: input, shape index: {}]
  %s2 = inlined_call_operand.vmem [shape: f32[3,1,128], index: 2, kind: input, shape index: {}]
  %s3 = inlined_call_operand.hbm [shape: f32[64,384], index: 3, kind: output, shape index: {}]
  %s4 = sld [smem:[#allocation0]]
  $region53: #{tpu_custom_call.1} parent=0
    _
  %s6 = ssub.s32 1, %s4
  %s7 = scalar_select 0, %s6, %s4
  $region1: #{tpu_custom_call.1} parent=0
    #allocation2 [shape = 'u8[16384]{0}', space=vmem, size = 0x4000, scoped, tag = 'input window, operand 0']
    #allocation3 [shape = 's32[2]{0}', space=sflag, size = 0x8, scoped, tag = 'scoped memory for tpu_custom_call.1']
    #allocation4 [shape = 's32[2]{0}', space=sflag, size = 0x8, scoped, tag = 'scoped memory for tpu_custom_call.1']
    #allocation5 [shape = 'u8[196608]{0}', space=vmem, size = 0x30000, scoped, tag = 'input window, operand 1, single buffered']
    #allocation6 [shape = 's32[1]{0}', space=sflag, size = 0x4, scoped, tag = 'scoped memory for tpu_custom_call.1']
    #allocation7 [shape = 'u8[49152]{0}', space=vmem, size = 0xc000, scoped, tag = 'output window, operand 0']
    %8 = vsyncpa [#allocation3], 0
    %s9 = scalar_lea.sflag [#allocation3], 1
    %10 = vsyncpa %s9, 0
    %11 = vsyncpa [#allocation6], 0
    %12 = vsyncpa [#allocation4], 0
    %s13 = scalar_lea.sflag [#allocation4], 1
    %14 = vsyncpa %s13, 0
    loop: start=0, step=1, limit=6
    $region2: #{tpu_custom_call.1} parent=1 // loop_pre_header
      _
    $region3: #{tpu_custom_call.1} parent=1 // loop_header
      %s16 = sphi 0, %s20
      %p17 = scmp.ge.s32.totalorder %s16, 6
      %s26 = sphi 0, %s28
      %s29 = sphi 0, %s26
      %s30 = sphi 0, %s29
      %s46 = sphi 0, %s30
      %s50 = sphi 0, %s50
      %s52 = sphi 0, %s50
      %s53 = sphi 0, %s52
      %s67 = sphi 0, %s53
      %s71 = sphi 0, %s71
      %s73 = sphi 0, %s71
      %s74 = sphi 0, %s73
      %s88 = sphi 0, %s74
      %s94 = sphi 0, %s96
      %s97 = sphi 0, %s94
      %s98 = sphi 0, %s97
      %s114 = sphi 0, %s98
    $region4: #{tpu_custom_call.1} parent=1 // loop_header_branch
      %19 = sbr.rel (%p17) target = $region8
    $region5: #{tpu_custom_call.1} parent=1 // loop_body
      %s21 = ssub.s32 %s16, 1
      %s22 = ssub.s32 %s16, 2
      %s23 = sadd.s32 %s16, 1
      %s24 = ssub.s32 %s16, %s23
      %p25 = scmp.eq.s32.totalorder %s24, 0
      %s27 = sadd.s32 %s26, 1
      %s28 = scalar_select %p25, %s26, %s27
      %p31 = pneg %p25
      %p32 = scmp.eq.s32.totalorder %s16, 3
      %p33 = por %p31, %p32
      %p34 = scmp.ne.s32.totalorder %s26, %s29
      %p35 = scmp.eq.s32.totalorder %s16, 0
      %p36 = por %p34, %p35
      %p37 = scmp.ne.s32.totalorder %s26, %s29
      %p38 = scmp.eq.s32.totalorder %s21, 3
      %p39 = por %p37, %p38
      %p40 = scmp.ne.s32.totalorder %s29, %s30
      %p41 = scmp.eq.s32.totalorder %s21, 0
      %p42 = por %p40, %p41
      %p43 = scmp.ne.s32.totalorder %s29, %s30
      %p44 = scmp.eq.s32.totalorder %s22, 3
      %p45 = por %p43, %p44
      %p47 = scmp.ne.s32.totalorder %s30, %s46
      %p48 = scmp.eq.s32.totalorder %s22, 0
      %p49 = por %p47, %p48
      %s51 = sadd.s32 %s50, 1
      %p54 = scmp.eq.s32.totalorder %s16, 3
      %p55 = scmp.ne.s32.totalorder %s50, %s52
      %p56 = scmp.eq.s32.totalorder %s16, 0
      %p57 = por %p55, %p56
      %p58 = scmp.ne.s32.totalorder %s50, %s52
      %p59 = scmp.eq.s32.totalorder %s21, 3
      %p60 = por %p58, %p59
      %p61 = scmp.ne.s32.totalorder %s52, %s53
      %p62 = scmp.eq.s32.totalorder %s21, 0
      %p63 = por %p61, %p62
      %p64 = scmp.ne.s32.totalorder %s52, %s53
      %p65 = scmp.eq.s32.totalorder %s22, 3
      %p66 = por %p64, %p65
      %p68 = scmp.ne.s32.totalorder %s53, %s67
      %p69 = scmp.eq.s32.totalorder %s22, 0
      %p70 = por %p68, %p69
      %s72 = sadd.s32 %s71, 1
      %p75 = scmp.eq.s32.totalorder %s16, 3
      %p76 = scmp.ne.s32.totalorder %s71, %s73
      %p77 = scmp.eq.s32.totalorder %s16, 0
      %p78 = por %p76, %p77
      %p79 = scmp.ne.s32.totalorder %s71, %s73
      %p80 = scmp.eq.s32.totalorder %s21, 3
      %p81 = por %p79, %p80
      %p82 = scmp.ne.s32.totalorder %s73, %s74
      %p83 = scmp.eq.s32.totalorder %s21, 0
      %p84 = por %p82, %p83
      %p85 = scmp.ne.s32.totalorder %s73, %s74
      %p86 = scmp.eq.s32.totalorder %s22, 3
      %p87 = por %p85, %p86
      %p89 = scmp.ne.s32.totalorder %s74, %s88
      %p90 = scmp.eq.s32.totalorder %s22, 0
      %p91 = por %p89, %p90
      %s92 = ssub.s32 %s16, %s23
      %p93 = scmp.eq.s32.totalorder %s92, 0
      %s95 = sadd.s32 %s94, 1
      %s96 = scalar_select %p93, %s94, %s95
      %p99 = pneg %p93
      %p100 = scmp.eq.s32.totalorder %s16, 3
      %p101 = por %p99, %p100
      %p102 = scmp.ne.s32.totalorder %s94, %s97
      %p103 = scmp.eq.s32.totalorder %s16, 0
      %p104 = por %p102, %p103
      %p105 = scmp.ne.s32.totalorder %s94, %s97
      %p106 = scmp.eq.s32.totalorder %s21, 3
      %p107 = por %p105, %p106
      %p108 = scmp.ne.s32.totalorder %s97, %s98
      %p109 = scmp.eq.s32.totalorder %s21, 0
      %p110 = por %p108, %p109
      %p111 = scmp.ne.s32.totalorder %s97, %s98
      %p112 = scmp.eq.s32.totalorder %s22, 3
      %p113 = por %p111, %p112
      %p115 = scmp.ne.s32.totalorder %s98, %s114
      %p116 = scmp.eq.s32.totalorder %s22, 0
      %p117 = por %p115, %p116
      %p118 = scmp.le.s32.totalorder 1, %s16
      %p119 = scmp.lt.s32.totalorder %s16, 5
      %p120 = pnand %p118, %p119
      %p121 = pneg %p120
      // Predicated region
      $region9: #{tpu_custom_call.1} parent=5 // pred_check
        _
      $region10: #{tpu_custom_call.1} parent=5 // pred_check_branch
        %123 = sbr.rel (%p120) target = $region12
      $region11: #{tpu_custom_call.1} parent=5 // pred_region
        %s124 = ssub.s32 %s16, 1
        // Predicated region
        $region13: #{tpu_custom_call.1} parent=11 // pred_check
          %p125 = pneg %p63
        $region14: #{tpu_custom_call.1} parent=11 // pred_check_branch
          %127 = sbr.rel (%p125) target = $region16
        $region15: #{tpu_custom_call.1} parent=11 // pred_region
          %s129 = ssub.s32 6144, 6144
          %130 = vsyncadd [#allocation6], %s129
          %s131 = sshll.u32 [#allocation5], 4
          %s132 = int_to_ptr.vmem [resolvable:$true] %s131
          %137 = dma.hbm_to_vmem [thread:$0]  %s1, 6144, %s132, [#allocation6], 128, 128, 8
        $region16: #{tpu_custom_call.1} parent=11 // pred_fallthru
          _
        // Predicated region
        $region17: #{tpu_custom_call.1} parent=11 // pred_check
          %p138 = pneg %p84
        $region18: #{tpu_custom_call.1} parent=11 // pred_check_branch
          %140 = sbr.rel (%p138) target = $region20
        $region19: #{tpu_custom_call.1} parent=11 // pred_region
          _
        $region20: #{tpu_custom_call.1} parent=11 // pred_fallthru
          _
      $region12: #{tpu_custom_call.1} parent=5 // pred_fallthru
        _
      %p141 = scmp.lt.s32.totalorder %s16, 4
      // Predicated region
      $region21: #{tpu_custom_call.1} parent=5 // pred_check
        %p142 = pneg %p141
      $region22: #{tpu_custom_call.1} parent=5 // pred_check_branch
        %144 = sbr.rel (%p142) target = $region24
      $region23: #{tpu_custom_call.1} parent=5 // pred_region
        // Predicated region
        $region25: #{tpu_custom_call.1} parent=23 // pred_check
          %p145 = pneg %p36
        $region26: #{tpu_custom_call.1} parent=23 // pred_check_branch
          %147 = sbr.rel (%p145) target = $region28
        $region27: #{tpu_custom_call.1} parent=23 // pred_region
          %s148 = sand.u32 %s26, 1
          %s149 = scalar_lea.sflag [#allocation3], %s148
          %s150 = sand.u32 %s26, 1
          %s151 = smul.addr %s150, 16
          %s152 = scalar_lea.vmem [#allocation2], %s151
          %s153 = smul.u32 2, %s16
          %s155 = ssub.s32 256, 256
          %156 = vsyncadd %s149, %s155
          %s157 = smul.addr %s153, 128
          %s158 = scalar_lea.hbm %s0, %s157
          %s159 = sshll.u32 %s152, 4
          %s160 = int_to_ptr.vmem [resolvable:$true] %s159
          %165 = dma.hbm_to_vmem [thread:$0]  %s158, 256, %s160, %s149, 128, 128, 8
        $region28: #{tpu_custom_call.1} parent=23 // pred_fallthru
          _
      $region24: #{tpu_custom_call.1} parent=5 // pred_fallthru
        _
      %p166 = scmp.le.s32.totalorder 1, %s16
      %p167 = scmp.lt.s32.totalorder %s16, 5
      %p168 = pnand %p166, %p167
      %p169 = pneg %p168
      // Predicated region
      $region29: #{tpu_custom_call.1} parent=5 // pred_check
        _
      $region30: #{tpu_custom_call.1} parent=5 // pred_check_branch
        %171 = sbr.rel (%p168) target = $region32
      $region31: #{tpu_custom_call.1} parent=5 // pred_region
        %s172 = ssub.s32 %s16, 1
        %s173 = sand.u32 %s29, 1
        %s174 = scalar_lea.sflag [#allocation3], %s173
        %s175 = sand.u32 %s29, 1
        %s176 = smul.addr %s175, 16
        %s177 = scalar_lea.vmem [#allocation2], %s176
        // Predicated region
        $region33: #{tpu_custom_call.1} parent=31 // pred_check
          %p178 = pneg %p42
        $region34: #{tpu_custom_call.1} parent=31 // pred_check_branch
          %180 = sbr.rel (%p178) target = $region36
        $region35: #{tpu_custom_call.1} parent=31 // pred_region
          %181 = dma.done %s174, 256
        $region36: #{tpu_custom_call.1} parent=31 // pred_fallthru
          _
        // Predicated region
        $region37: #{tpu_custom_call.1} parent=31 // pred_check
          %p182 = pneg %p63
        $region38: #{tpu_custom_call.1} parent=31 // pred_check_branch
          %184 = sbr.rel (%p182) target = $region40
        $region39: #{tpu_custom_call.1} parent=31 // pred_region
          %185 = dma.done [#allocation6], 6144
        $region40: #{tpu_custom_call.1} parent=31 // pred_fallthru
          _
        %s186 = sand.u32 %s29, 1
        %s187 = scalar_lea.sflag [#allocation3], %s186
        %s188 = sand.u32 %s29, 1
        %s189 = smul.addr %s188, 16
        %s190 = scalar_lea.vmem [#allocation2], %s189
        %p191 = pneg %p42
        %p192 = pneg %p39
        %p193 = pneg %p63
        %p194 = pneg %p60
        %p195 = pneg %p84
        %p196 = pneg %p81
        %p197 = pneg %p110
        %p198 = pneg %p107
        %s199 = sand.u32 %s97, 1
        %s200 = scalar_lea.sflag [#allocation4], %s199
        %s201 = sand.u32 %s97, 1
        %s202 = smul.addr %s201, 48
        %s203 = scalar_lea.vmem [#allocation7], %s202
        %s204 = smul.u32 2, %s21
        %s205 = smul.u32 2, %s21
        %v206 = vld [vmem:[%s177] sm:$0xff]
        %v207 = vld [vmem:[%s177 + $0x8] sm:$0xff]
        %208 = vadd.xlane.f32.xlu0 %v206
        %v209 = vpop.xlane.xlu0 %208
        %210 = vadd.xlane.f32.xlu0 %v207
        %v211 = vpop.xlane.xlu0 %210
        %v212 = vld [vmem:[#allocation5] sm:$0xff]
        %v213 = vld [vmem:[#allocation5 + $0x8] sm:$0xff]
        %v214 = vld [vmem:[#allocation5 + $0x10] sm:$0xff]
        %v215 = vld [vmem:[#allocation5 + $0x18] sm:$0xff]
        %v216 = vld [vmem:[#allocation5 + $0x20] sm:$0xff]
        %v217 = vld [vmem:[#allocation5 + $0x28] sm:$0xff]
        %v218 = vld [vmem:[#allocation5 + $0x30] sm:$0xff]
        %v219 = vld [vmem:[#allocation5 + $0x38] sm:$0xff]
        %v220 = vld [vmem:[#allocation5 + $0x40] sm:$0xff]
        %v221 = vld [vmem:[#allocation5 + $0x48] sm:$0xff]
        %v222 = vld [vmem:[#allocation5 + $0x50] sm:$0xff]
        %v223 = vld [vmem:[#allocation5 + $0x58] sm:$0xff]
        %v224 = vld [vmem:[#allocation5 + $0x60] sm:$0xff]
        %v225 = vld [vmem:[#allocation5 + $0x68] sm:$0xff]
        %v226 = vld [vmem:[#allocation5 + $0x70] sm:$0xff]
        %v227 = vld [vmem:[#allocation5 + $0x78] sm:$0xff]
        %v228 = vld [vmem:[%s2] sm:$0x1]
        %v230 = vlaneseq
        %v231 = vshrl.u32 %v230, 7
        %v232 = vsub.s32 0, %v231
        %v233 = vrot.slane %v228, %v232
        %235 = vmatprep.subr.mxu0 0.0
        %236 = vmatpush1.msra.mxu0 %v227
        %237 = vmatprep.subr.mxu0 0.0
        %238 = vmatpush1.msra.mxu0 %v226
        %239 = vmatprep.subr.mxu0 0.0
        %240 = vmatpush1.msra.mxu0 %v225
        %241 = vmatprep.subr.mxu0 0.0
        %242 = vmatpush1.msra.mxu0 %v224
        %243 = vmatprep.subr.mxu0 0.0
        %244 = vmatpush1.msra.mxu0 %v223
        %245 = vmatprep.subr.mxu0 0.0
        %246 = vmatpush1.msra.mxu0 %v222
        %247 = vmatprep.subr.mxu0 0.0
        %248 = vmatpush1.msra.mxu0 %v221
        %249 = vmatprep.subr.mxu0 0.0
        %250 = vmatpush1.msra.mxu0 %v220
        %251 = vmatprep.subr.mxu0 0.0
        %252 = vmatpush1.msra.mxu0 %v219
        %253 = vmatprep.subr.mxu0 0.0
        %254 = vmatpush1.msra.mxu0 %v218
        %255 = vmatprep.subr.mxu0 0.0
        %256 = vmatpush1.msra.mxu0 %v217
        %257 = vmatprep.subr.mxu0 0.0
        %258 = vmatpush1.msra.mxu0 %v216
        %259 = vmatprep.subr.mxu0 0.0
        %260 = vmatpush1.msra.mxu0 %v215
        %261 = vmatprep.subr.mxu0 0.0
        %262 = vmatpush1.msra.mxu0 %v214
        %263 = vmatprep.subr.mxu0 0.0
        %264 = vmatpush1.msra.mxu0 %v213
        %265 = vmatprep.subr.mxu0 0.0
        %266 = vmatpush1.msra.mxu0 %v212
        %267 = vmatprep.subr.mxu0 0.0
        %268 = vmatpush2.msra.mxu0 0.0
        %269 = vmatprep.subr.mxu0 0.0
        %270 = vmatpush2.msra.mxu0 0.0
        %271 = vmatprep.subr.mxu0 0.0
        %272 = vmatpush2.msra.mxu0 0.0
        %273 = vmatprep.subr.mxu0 0.0
        %274 = vmatpush2.msra.mxu0 0.0
        %275 = vmatprep.subr.mxu0 0.0
        %276 = vmatpush2.msra.mxu0 0.0
        %277 = vmatprep.subr.mxu0 0.0
        %278 = vmatpush2.msra.mxu0 0.0
        %279 = vmatprep.subr.mxu0 0.0
        %280 = vmatpush2.msra.mxu0 0.0
        %281 = vmatprep.subr.mxu0 0.0
        %282 = vmatpush2.msra.mxu0 0.0
        %283 = vmatprep.subr.mxu0 0.0
        %284 = vmatpush2.msra.mxu0 0.0
        %285 = vmatprep.subr.mxu0 0.0
        %286 = vmatpush2.msra.mxu0 0.0
        %287 = vmatprep.subr.mxu0 0.0
        %288 = vmatpush2.msra.mxu0 0.0
        %289 = vmatprep.subr.mxu0 0.0
        %290 = vmatpush2.msra.mxu0 0.0
        %291 = vmatprep.subr.mxu0 0.0
        %292 = vmatpush2.msra.mxu0 0.0
        %293 = vmatprep.subr.mxu0 0.0
        %294 = vmatpush2.msra.mxu0 0.0
        %295 = vmatprep.subr.mxu0 0.0
        %296 = vmatpush2.msra.mxu0 0.0
        %297 = vmatprep.subr.mxu0 0.0
        %298 = vmatpush2.msra.mxu0 0.0
        %299 = vmatprep.mubr.f32.mxu0 0.0
        %300 = vmatmul.mubr.f32.gmra.mxu0 %v206
        %v301 = vpop.f32.mrf.mxu0
        %v302 = vadd.f32 %v233, %v301
        %v303 = vpop.f32.mrf.mxu0
        %304 = vmatprep.mubr.f32.mxu0 0.0
        %305 = vmatmul.mubr.f32.gmra.mxu0 %v207
        %v306 = vpop.f32.mrf.mxu0
        %v307 = vadd.f32 %v233, %v306
        %v308 = vpop.f32.mrf.mxu0
        %309 = vdwg.mxu0
        %310 = vst [vmem:[%s203] sm:$0xff] %v302
        %311 = vst [vmem:[%s203 + $0x18] sm:$0xff] %v307
        %312 = vadd.xlane.f32.xlu0 %v302
        %v313 = vpop.xlane.xlu0 %312
        %314 = vadd.xlane.f32.xlu0 %v307
        %v315 = vpop.xlane.xlu0 %314
        %v316 = vmul.f32 %v302, %v206
        %v317 = vmul.f32 %v307, %v207
        %318 = vadd.xlane.f32.xlu0 %v316
        %v319 = vpop.xlane.xlu0 %318
        %320 = vadd.xlane.f32.xlu0 %v317
        %v321 = vpop.xlane.xlu0 %320
        %v322 = vadd.f32 %v319, 0.0
        %v323 = vadd.f32 %v321, 0.0
        %v324 = vmul.f32 %v209, 0.0
        %v325 = vmul.f32 %v211, 0.0
        %v326 = vadd.f32 %v322, %v324
        %v327 = vadd.f32 %v323, %v325
        %v328 = vadd.f32 %v302, %v326
        %v329 = vadd.f32 %v307, %v327
        %s330 = scalar_lea.vmem [#allocation5], 128
        %v331 = vld [vmem:[%s330] sm:$0xff]
        %v332 = vld [vmem:[%s330 + $0x8] sm:$0xff]
        %v333 = vld [vmem:[%s330 + $0x10] sm:$0xff]
        %v334 = vld [vmem:[%s330 + $0x18] sm:$0xff]
        %v335 = vld [vmem:[%s330 + $0x20] sm:$0xff]
        %v336 = vld [vmem:[%s330 + $0x28] sm:$0xff]
        %v337 = vld [vmem:[%s330 + $0x30] sm:$0xff]
        %v338 = vld [vmem:[%s330 + $0x38] sm:$0xff]
        %v339 = vld [vmem:[%s330 + $0x40] sm:$0xff]
        %v340 = vld [vmem:[%s330 + $0x48] sm:$0xff]
        %v341 = vld [vmem:[%s330 + $0x50] sm:$0xff]
        %v342 = vld [vmem:[%s330 + $0x58] sm:$0xff]
        %v343 = vld [vmem:[%s330 + $0x60] sm:$0xff]
        %v344 = vld [vmem:[%s330 + $0x68] sm:$0xff]
        %v345 = vld [vmem:[%s330 + $0x70] sm:$0xff]
        %v346 = vld [vmem:[%s330 + $0x78] sm:$0xff]
        %s347 = scalar_lea.vmem %s2, 1
        %v348 = vld [vmem:[%s347] sm:$0x1]
        %v350 = vlaneseq
        %v351 = vshrl.u32 %v350, 7
        %v352 = vsub.s32 0, %v351
        %v353 = vrot.slane %v348, %v352
        %355 = vmatprep.subr.mxu0 0.0
        %356 = vmatpush1.msra.mxu0 %v346
        %357 = vmatprep.subr.mxu0 0.0
        %358 = vmatpush1.msra.mxu0 %v345
        %359 = vmatprep.subr.mxu0 0.0
        %360 = vmatpush1.msra.mxu0 %v344
        %361 = vmatprep.subr.mxu0 0.0
        %362 = vmatpush1.msra.mxu0 %v343
        %363 = vmatprep.subr.mxu0 0.0
        %364 = vmatpush1.msra.mxu0 %v342
        %365 = vmatprep.subr.mxu0 0.0
        %366 = vmatpush1.msra.mxu0 %v341
        %367 = vmatprep.subr.mxu0 0.0
        %368 = vmatpush1.msra.mxu0 %v340
        %369 = vmatprep.subr.mxu0 0.0
        %370 = vmatpush1.msra.mxu0 %v339
        %371 = vmatprep.subr.mxu0 0.0
        %372 = vmatpush1.msra.mxu0 %v338
        %373 = vmatprep.subr.mxu0 0.0
        %374 = vmatpush1.msra.mxu0 %v337
        %375 = vmatprep.subr.mxu0 0.0
        %376 = vmatpush1.msra.mxu0 %v336
        %377 = vmatprep.subr.mxu0 0.0
        %378 = vmatpush1.msra.mxu0 %v335
        %379 = vmatprep.subr.mxu0 0.0
        %380 = vmatpush1.msra.mxu0 %v334
        %381 = vmatprep.subr.mxu0 0.0
        %382 = vmatpush1.msra.mxu0 %v333
        %383 = vmatprep.subr.mxu0 0.0
        %384 = vmatpush1.msra.mxu0 %v332
        %385 = vmatprep.subr.mxu0 0.0
        %386 = vmatpush1.msra.mxu0 %v331
        %387 = vmatprep.subr.mxu0 0.0
        %388 = vmatpush2.msra.mxu0 0.0
        %389 = vmatprep.subr.mxu0 0.0
        %390 = vmatpush2.msra.mxu0 0.0
        %391 = vmatprep.subr.mxu0 0.0
        %392 = vmatpush2.msra.mxu0 0.0
        %393 = vmatprep.subr.mxu0 0.0
        %394 = vmatpush2.msra.mxu0 0.0
        %395 = vmatprep.subr.mxu0 0.0
        %396 = vmatpush2.msra.mxu0 0.0
        %397 = vmatprep.subr.mxu0 0.0
        %398 = vmatpush2.msra.mxu0 0.0
        %399 = vmatprep.subr.mxu0 0.0
        %400 = vmatpush2.msra.mxu0 0.0
        %401 = vmatprep.subr.mxu0 0.0
        %402 = vmatpush2.msra.mxu0 0.0
        %403 = vmatprep.subr.mxu0 0.0
        %404 = vmatpush2.msra.mxu0 0.0
        %405 = vmatprep.subr.mxu0 0.0
        %406 = vmatpush2.msra.mxu0 0.0
        %407 = vmatprep.subr.mxu0 0.0
        %408 = vmatpush2.msra.mxu0 0.0
        %409 = vmatprep.subr.mxu0 0.0
        %410 = vmatpush2.msra.mxu0 0.0
        %411 = vmatprep.subr.mxu0 0.0
        %412 = vmatpush2.msra.mxu0 0.0
        %413 = vmatprep.subr.mxu0 0.0
        %414 = vmatpush2.msra.mxu0 0.0
        %415 = vmatprep.subr.mxu0 0.0
        %416 = vmatpush2.msra.mxu0 0.0
        %417 = vmatprep.subr.mxu0 0.0
        %418 = vmatpush2.msra.mxu0 0.0
        %419 = vmatprep.mubr.f32.mxu0 0.0
        %420 = vmatmul.mubr.f32.gmra.mxu0 %v328
        %v421 = vpop.f32.mrf.mxu0
        %v422 = vadd.f32 %v353, %v421
        %v423 = vpop.f32.mrf.mxu0
        %424 = vmatprep.mubr.f32.mxu0 0.0
        %425 = vmatmul.mubr.f32.gmra.mxu0 %v329
        %v426 = vpop.f32.mrf.mxu0
        %v427 = vadd.f32 %v353, %v426
        %v428 = vpop.f32.mrf.mxu0
        %429 = vdwg.mxu0
        %430 = vst [vmem:[%s203 + $0x8] sm:$0xff] %v422
        %431 = vst [vmem:[%s203 + $0x20] sm:$0xff] %v427
        %v432 = vmul.f32 %v422, %v206
        %v433 = vmul.f32 %v427, %v207
        %434 = vadd.xlane.f32.xlu0 %v432
        %v435 = vpop.xlane.xlu0 %434
        %436 = vadd.xlane.f32.xlu0 %v433
        %v437 = vpop.xlane.xlu0 %436
        %v438 = vadd.f32 %v435, 0.0
        %v439 = vadd.f32 %v437, 0.0
        %v440 = vadd.f32 %v438, %v324
        %v441 = vadd.f32 %v439, %v325
        %v442 = vld [vmem:[%s203] sm:$0xff]
        %v443 = vld [vmem:[%s203 + $0x18] sm:$0xff]
        %v444 = vmul.f32 %v422, %v442
        %v445 = vmul.f32 %v427, %v443
        %446 = vadd.xlane.f32.xlu0 %v444
        %v447 = vpop.xlane.xlu0 %446
        %448 = vadd.xlane.f32.xlu0 %v445
        %v449 = vpop.xlane.xlu0 %448
        %v450 = vadd.f32 %v440, %v447
        %v451 = vadd.f32 %v441, %v449
        %v452 = vmul.f32 %v440, %v313
        %v453 = vmul.f32 %v441, %v315
        %v454 = vadd.f32 %v450, %v452
        %v455 = vadd.f32 %v451, %v453
        %v456 = vadd.f32 %v422, %v454
        %v457 = vadd.f32 %v427, %v455
        %s458 = scalar_lea.vmem [#allocation5], 256
        %v459 = vld [vmem:[%s458] sm:$0xff]
        %v460 = vld [vmem:[%s458 + $0x8] sm:$0xff]
        %v461 = vld [vmem:[%s458 + $0x10] sm:$0xff]
        %v462 = vld [vmem:[%s458 + $0x18] sm:$0xff]
        %v463 = vld [vmem:[%s458 + $0x20] sm:$0xff]
        %v464 = vld [vmem:[%s458 + $0x28] sm:$0xff]
        %v465 = vld [vmem:[%s458 + $0x30] sm:$0xff]
        %v466 = vld [vmem:[%s458 + $0x38] sm:$0xff]
        %v467 = vld [vmem:[%s458 + $0x40] sm:$0xff]
        %v468 = vld [vmem:[%s458 + $0x48] sm:$0xff]
        %v469 = vld [vmem:[%s458 + $0x50] sm:$0xff]
        %v470 = vld [vmem:[%s458 + $0x58] sm:$0xff]
        %v471 = vld [vmem:[%s458 + $0x60] sm:$0xff]
        %v472 = vld [vmem:[%s458 + $0x68] sm:$0xff]
        %v473 = vld [vmem:[%s458 + $0x70] sm:$0xff]
        %v474 = vld [vmem:[%s458 + $0x78] sm:$0xff]
        %s475 = scalar_lea.vmem %s2, 2
        %v476 = vld [vmem:[%s475] sm:$0x1]
        %v478 = vlaneseq
        %v479 = vshrl.u32 %v478, 7
        %v480 = vsub.s32 0, %v479
        %v481 = vrot.slane %v476, %v480
        %483 = vmatprep.subr.mxu0 0.0
        %484 = vmatpush1.msra.mxu0 %v474
        %485 = vmatprep.subr.mxu0 0.0
        %486 = vmatpush1.msra.mxu0 %v473
        %487 = vmatprep.subr.mxu0 0.0
        %488 = vmatpush1.msra.mxu0 %v472
        %489 = vmatprep.subr.mxu0 0.0
        %490 = vmatpush1.msra.mxu0 %v471
        %491 = vmatprep.subr.mxu0 0.0
        %492 = vmatpush1.msra.mxu0 %v470
        %493 = vmatprep.subr.mxu0 0.0
        %494 = vmatpush1.msra.mxu0 %v469
        %495 = vmatprep.subr.mxu0 0.0
        %496 = vmatpush1.msra.mxu0 %v468
        %497 = vmatprep.subr.mxu0 0.0
        %498 = vmatpush1.msra.mxu0 %v467
        %499 = vmatprep.subr.mxu0 0.0
        %500 = vmatpush1.msra.mxu0 %v466
        %501 = vmatprep.subr.mxu0 0.0
        %502 = vmatpush1.msra.mxu0 %v465
        %503 = vmatprep.subr.mxu0 0.0
        %504 = vmatpush1.msra.mxu0 %v464
        %505 = vmatprep.subr.mxu0 0.0
        %506 = vmatpush1.msra.mxu0 %v463
        %507 = vmatprep.subr.mxu0 0.0
        %508 = vmatpush1.msra.mxu0 %v462
        %509 = vmatprep.subr.mxu0 0.0
        %510 = vmatpush1.msra.mxu0 %v461
        %511 = vmatprep.subr.mxu0 0.0
        %512 = vmatpush1.msra.mxu0 %v460
        %513 = vmatprep.subr.mxu0 0.0
        %514 = vmatpush1.msra.mxu0 %v459
        %515 = vmatprep.subr.mxu0 0.0
        %516 = vmatpush2.msra.mxu0 0.0
        %517 = vmatprep.subr.mxu0 0.0
        %518 = vmatpush2.msra.mxu0 0.0
        %519 = vmatprep.subr.mxu0 0.0
        %520 = vmatpush2.msra.mxu0 0.0
        %521 = vmatprep.subr.mxu0 0.0
        %522 = vmatpush2.msra.mxu0 0.0
        %523 = vmatprep.subr.mxu0 0.0
        %524 = vmatpush2.msra.mxu0 0.0
        %525 = vmatprep.subr.mxu0 0.0
        %526 = vmatpush2.msra.mxu0 0.0
        %527 = vmatprep.subr.mxu0 0.0
        %528 = vmatpush2.msra.mxu0 0.0
        %529 = vmatprep.subr.mxu0 0.0
        %530 = vmatpush2.msra.mxu0 0.0
        %531 = vmatprep.subr.mxu0 0.0
        %532 = vmatpush2.msra.mxu0 0.0
        %533 = vmatprep.subr.mxu0 0.0
        %534 = vmatpush2.msra.mxu0 0.0
        %535 = vmatprep.subr.mxu0 0.0
        %536 = vmatpush2.msra.mxu0 0.0
        %537 = vmatprep.subr.mxu0 0.0
        %538 = vmatpush2.msra.mxu0 0.0
        %539 = vmatprep.subr.mxu0 0.0
        %540 = vmatpush2.msra.mxu0 0.0
        %541 = vmatprep.subr.mxu0 0.0
        %542 = vmatpush2.msra.mxu0 0.0
        %543 = vmatprep.subr.mxu0 0.0
        %544 = vmatpush2.msra.mxu0 0.0
        %545 = vmatprep.subr.mxu0 0.0
        %546 = vmatpush2.msra.mxu0 0.0
        %547 = vmatprep.mubr.f32.mxu0 0.0
        %548 = vmatmul.mubr.f32.gmra.mxu0 %v456
        %v549 = vpop.f32.mrf.mxu0
        %v550 = vadd.f32 %v481, %v549
        %v551 = vpop.f32.mrf.mxu0
        %552 = vmatprep.mubr.f32.mxu0 0.0
        %553 = vmatmul.mubr.f32.gmra.mxu0 %v457
        %v554 = vpop.f32.mrf.mxu0
        %v555 = vadd.f32 %v481, %v554
        %v556 = vpop.f32.mrf.mxu0
        %557 = vdwg.mxu0
        %558 = vst [vmem:[%s203 + $0x10] sm:$0xff] %v550
        %559 = vst [vmem:[%s203 + $0x28] sm:$0xff] %v555
        %s560 = sand.u32 %s97, 1
        %s561 = scalar_lea.sflag [#allocation4], %s560
        %s562 = sand.u32 %s97, 1
        %s563 = smul.addr %s562, 48
        %s564 = scalar_lea.vmem [#allocation7], %s563
        // Predicated region
        $region41: #{tpu_custom_call.1} parent=31 // pred_check
          %p565 = pneg %p107
        $region42: #{tpu_custom_call.1} parent=31 // pred_check_branch
          %567 = sbr.rel (%p565) target = $region44
        $region43: #{tpu_custom_call.1} parent=31 // pred_region
          %s568 = smul.u32 2, %s21
          %s570 = ssub.s32 768, 768
          %571 = vsyncadd %s561, %s570
          %s572 = smul.addr %s568, 3
          %s573 = smul.addr %s572, 128
          %s574 = scalar_lea.hbm %s3, %s573
          %s575 = sshll.u32 %s564, 4
          %s576 = int_to_ptr.vmem [resolvable:$true] %s575
          %581 = dma.vmem_to_hbm [thread:$0]  %s576, 768, %s574, %s561, 384, 384, 24
        $region44: #{tpu_custom_call.1} parent=31 // pred_fallthru
          _
      $region32: #{tpu_custom_call.1} parent=5 // pred_fallthru
        _
      %p582 = scmp.le.s32.totalorder 2, %s16
      // Predicated region
      $region45: #{tpu_custom_call.1} parent=5 // pred_check
        %p583 = pneg %p582
      $region46: #{tpu_custom_call.1} parent=5 // pred_check_branch
        %585 = sbr.rel (%p583) target = $region48
      $region47: #{tpu_custom_call.1} parent=5 // pred_region
        %s586 = ssub.s32 %s16, 2
        // Predicated region
        $region49: #{tpu_custom_call.1} parent=47 // pred_check
          %p587 = pneg %p113
        $region50: #{tpu_custom_call.1} parent=47 // pred_check_branch
          %589 = sbr.rel (%p587) target = $region52
        $region51: #{tpu_custom_call.1} parent=47 // pred_region
          %s590 = sand.u32 %s98, 1
          %s591 = scalar_lea.sflag [#allocation4], %s590
          %s592 = sand.u32 %s98, 1
          %s593 = smul.addr %s592, 48
          %s594 = scalar_lea.vmem [#allocation7], %s593
          %595 = dma.done %s591, 768
        $region52: #{tpu_custom_call.1} parent=47 // pred_fallthru
          _
      $region48: #{tpu_custom_call.1} parent=5 // pred_fallthru
        _
    $region6: #{tpu_custom_call.1} parent=1 // loop_footer
      %s20 = sadd.s32 1, %s16
    $region7: #{tpu_custom_call.1} parent=1 // loop_footer_branch
      %15 = sbr.rel target = $region3
    $region8: #{tpu_custom_call.1} parent=1 // loop_exit
      _
    %596 = vsyncpa [#allocation3], 1
    %s597 = scalar_lea.sflag [#allocation3], 1
    %598 = vsyncpa %s597, 1
    %599 = vsyncpa [#allocation6], 1
    %600 = vsyncpa [#allocation4], 1
    %s601 = scalar_lea.sflag [#allocation4], 1
    %602 = vsyncpa %s601, 1

</llo_original>
